<compile_context>
chip_gen: v5e
topology: v5e:2x2
jax: 0.10.0
libtpu: 0.0.40
codegen_flags: <defaults>
</compile_context>

<pallas_src>
import jax
import jax.numpy as jnp
from jax.experimental import pallas as pl
from jax.experimental.pallas import tpu as pltpu

IN_FEATURES = 28 * 28
HIDDEN = 64
NUM_CLASSES = 10
PADDED_CLASSES = 128          # lane-dense output width (multiple of 128)
NEG_INF = -1e30               # mask value for padded class lanes


def mlp_kernel(x_ref, w1_ref, b1_ref, w2_ref, b2_ref, w3_ref, b3_ref,
               w4_ref, b4_ref, out_ref):
    # fc1 + relu  (bf16 MXU inputs, f32 accumulation / VPU math)
    h = jnp.dot(x_ref[...], w1_ref[...], preferred_element_type=jnp.float32)
    h = jnp.maximum(h + b1_ref[...], 0.0)
    # fc2 + relu
    h = jnp.dot(h.astype(jnp.bfloat16), w2_ref[...],
                preferred_element_type=jnp.float32)
    h = jnp.maximum(h + b2_ref[...], 0.0)
    # fc3 + relu
    h = jnp.dot(h.astype(jnp.bfloat16), w3_ref[...],
                preferred_element_type=jnp.float32)
    h = jnp.maximum(h + b3_ref[...], 0.0)
    # fc4 (padded to 128 lanes; padded lanes carry a -1e30 bias)
    logits = jnp.dot(h.astype(jnp.bfloat16), w4_ref[...],
                     preferred_element_type=jnp.float32)
    logits = logits + b4_ref[...]
    # Numerically stable log_softmax over the class (lane) axis.  The -1e30
    # padded lanes never win the max and contribute exp(~-1e30)==0 to the
    # denominator, so the 10 real classes are exact.
    m = jnp.max(logits, axis=1, keepdims=True)
    shifted = logits - m
    lse = jnp.log(jnp.sum(jnp.exp(shifted), axis=1, keepdims=True))
    out_ref[...] = shifted - lse


def net_forward(x, params, *, tb=512):
    """x: [B, 784] float32 -> [B, 10] float32 log-probabilities."""
    w1, b1, w2, b2, w3, b3, w4, b4 = params
    B = x.shape[0]

    # ---- prepare operands -------------------------------------------------
    # Pad fc4 to a lane-dense 128-wide output; padded lanes masked via bias.
    w4p = jnp.zeros((HIDDEN, PADDED_CLASSES), jnp.float32)
    w4p = w4p.at[:, :NUM_CLASSES].set(w4)
    b4p = jnp.full((1, PADDED_CLASSES), NEG_INF, jnp.float32)
    b4p = b4p.at[:, :NUM_CLASSES].set(b4)

    # bf16 matmul operands; biases stay f32 (added in f32 inside the kernel).
    x_bf = x.astype(jnp.bfloat16)
    w1b, w2b, w3b, w4b = (w.astype(jnp.bfloat16) for w in (w1, w2, w3, w4p))
    b1f, b2f, b3f = (b.astype(jnp.float32) for b in (b1, b2, b3))

    # ---- batch tiling -----------------------------------------------------
    # TB must be a multiple of 8 (sublane constraint); cap it for small B and
    # keep double-buffered x tiles comfortably inside v7x's 64 MiB VMEM.
    tb = int(min(tb, max(8, -(-B // 8) * 8)))
    tb = max(8, (tb // 8) * 8)
    b_pad = -(-B // tb) * tb
    if b_pad != B:
        x_bf = jnp.pad(x_bf, ((0, b_pad - B), (0, 0)))
    grid = (b_pad // tb,)

    def resident(shape):
        return pl.BlockSpec(shape, lambda i: (0, 0))

    flops = 2 * b_pad * (IN_FEATURES * HIDDEN + 2 * HIDDEN * HIDDEN
                         + HIDDEN * PADDED_CLASSES)
    bytes_accessed = (b_pad * IN_FEATURES * 2                       # x (bf16)
                      + (IN_FEATURES * HIDDEN + 2 * HIDDEN * HIDDEN
                         + HIDDEN * PADDED_CLASSES) * 2             # weights
                      + (3 * HIDDEN + PADDED_CLASSES) * 4           # biases
                      + b_pad * PADDED_CLASSES * 4)                 # output
    transcendentals = b_pad * (PADDED_CLASSES + 1)                  # exp + log

    out = pl.pallas_call(
        mlp_kernel,
        out_shape=jax.ShapeDtypeStruct((b_pad, PADDED_CLASSES), jnp.float32),
        grid=grid,
        in_specs=[
            pl.BlockSpec((tb, IN_FEATURES), lambda i: (i, 0)),   # x tile
            resident((IN_FEATURES, HIDDEN)),                     # w1
            resident((1, HIDDEN)),                               # b1
            resident((HIDDEN, HIDDEN)),                          # w2
            resident((1, HIDDEN)),                               # b2
            resident((HIDDEN, HIDDEN)),                          # w3
            resident((1, HIDDEN)),                               # b3
            resident((HIDDEN, PADDED_CLASSES)),                  # w4 (padded)
            resident((1, PADDED_CLASSES)),                       # b4 (padded)
        ],
        out_specs=pl.BlockSpec((tb, PADDED_CLASSES), lambda i: (i, 0)),
        compiler_params=pltpu.CompilerParams(
            dimension_semantics=("parallel",),
            vmem_limit_bytes=48 << 20,
        ),
        cost_estimate=pl.CostEstimate(
            flops=flops,
            transcendentals=transcendentals,
            bytes_accessed=bytes_accessed,
        ),
    )(x_bf, w1b, b1f, w2b, b2f, w3b, b3f, w4b, b4p)

    return out[:B, :NUM_CLASSES]


def init_params(key):
    """Deterministic PyTorch-style (uniform +/- 1/sqrt(fan_in)) init.

    Weights stored as [in_features, out_features] (transposed vs. torch)."""
    dims = [(IN_FEATURES, HIDDEN), (HIDDEN, HIDDEN),
            (HIDDEN, HIDDEN), (HIDDEN, NUM_CLASSES)]
    params = []
    for fan_in, fan_out in dims:
        key, kw, kb = jax.random.split(key, 3)
        bound = 1.0 / jnp.sqrt(float(fan_in))
        w = jax.random.uniform(kw, (fan_in, fan_out), jnp.float32,
                               minval=-bound, maxval=bound)
        b = jax.random.uniform(kb, (1, fan_out), jnp.float32,
                               minval=-bound, maxval=bound)
        params.extend([w, b])
    return tuple(params)


def net_forward_ref(x, params):
    """Pure-JAX f32 reference matching the PyTorch module."""
    w1, b1, w2, b2, w3, b3, w4, b4 = params
    h = jnp.maximum(x @ w1 + b1, 0.0)
    h = jnp.maximum(h @ w2 + b2, 0.0)
    h = jnp.maximum(h @ w3 + b3, 0.0)
    logits = h @ w4 + b4
    return jax.nn.log_softmax(logits, axis=1)


if __name__ == "__main__":
    key = jax.random.PRNGKey(0)
    key, kx1, kx2 = jax.random.split(key, 3)
    params = init_params(key)

    # Small batch, tile-divisible path (grid of 2 steps with tb=32).
    B1 = 64
    x1 = jax.random.normal(kx1, (B1, IN_FEATURES), dtype=jnp.float32)
    out1 = net_forward(x1, params, tb=32)
    jax.block_until_ready(out1)
    ref1 = net_forward_ref(x1, params)
    assert out1.shape == (B1, NUM_CLASSES)
    # bf16 matmul inputs -> loosened tolerance vs the f32 reference.
    assert jnp.allclose(out1, ref1, atol=5e-2, rtol=5e-2), "mismatch (B=64)"

    # Non-multiple batch exercises the row-padding path.
    B2 = 50
    x2 = jax.random.normal(kx2, (B2, IN_FEATURES), dtype=jnp.float32)
    out2 = net_forward(x2, params, tb=32)
    jax.block_until_ready(out2)
    ref2 = net_forward_ref(x2, params)
    assert out2.shape == (B2, NUM_CLASSES)
    assert jnp.allclose(out2, ref2, atol=5e-2, rtol=5e-2), "mismatch (B=50)"

    print("KERNEL_OK")
</pallas_src>

<mosaic_0001>
module attributes {stable_mosaic.version = 11 : i64} {
  func.func @mlp_kernel(%arg0: i32, %arg1: memref<32x784xbf16, #tpu.memory_space<vmem>>, %arg2: memref<784x64xbf16, #tpu.memory_space<vmem>>, %arg3: memref<1x64xf32, #tpu.memory_space<vmem>>, %arg4: memref<64x64xbf16, #tpu.memory_space<vmem>>, %arg5: memref<1x64xf32, #tpu.memory_space<vmem>>, %arg6: memref<64x64xbf16, #tpu.memory_space<vmem>>, %arg7: memref<1x64xf32, #tpu.memory_space<vmem>>, %arg8: memref<64x128xbf16, #tpu.memory_space<vmem>>, %arg9: memref<1x128xf32, #tpu.memory_space<vmem>>, %arg10: memref<32x128xf32, #tpu.memory_space<vmem>>) attributes {dimension_semantics = [#tpu.dimension_semantics<parallel>], iteration_bounds = array<i64: 2>, scalar_prefetch = 0 : i64, scratch_operands = 0 : i64, tpu.core_type = #tpu.core_type<tc>, window_params = [{transform_indices = @transform_0, window_bounds = array<i64: 32, 784>}, {pipeline_mode = #tpu.pipeline_mode<synchronous>, transform_indices = @transform_1, window_bounds = array<i64: 784, 64>}, {pipeline_mode = #tpu.pipeline_mode<synchronous>, transform_indices = @transform_2, window_bounds = array<i64: 1, 64>}, {pipeline_mode = #tpu.pipeline_mode<synchronous>, transform_indices = @transform_3, window_bounds = array<i64: 64, 64>}, {pipeline_mode = #tpu.pipeline_mode<synchronous>, transform_indices = @transform_4, window_bounds = array<i64: 1, 64>}, {pipeline_mode = #tpu.pipeline_mode<synchronous>, transform_indices = @transform_5, window_bounds = array<i64: 64, 64>}, {pipeline_mode = #tpu.pipeline_mode<synchronous>, transform_indices = @transform_6, window_bounds = array<i64: 1, 64>}, {pipeline_mode = #tpu.pipeline_mode<synchronous>, transform_indices = @transform_7, window_bounds = array<i64: 64, 128>}, {pipeline_mode = #tpu.pipeline_mode<synchronous>, transform_indices = @transform_8, window_bounds = array<i64: 1, 128>}, {transform_indices = @transform_9, window_bounds = array<i64: 32, 128>}]} {
    %c0 = arith.constant 0 : index
    %c0_0 = arith.constant 0 : index
    %0 = vector.load %arg1[%c0, %c0_0] : memref<32x784xbf16, #tpu.memory_space<vmem>>, vector<32x784xbf16>
    %c0_1 = arith.constant 0 : index
    %c0_2 = arith.constant 0 : index
    %1 = vector.load %arg2[%c0_1, %c0_2] : memref<784x64xbf16, #tpu.memory_space<vmem>>, vector<784x64xbf16>
    %cst = arith.constant dense<0.000000e+00> : vector<32x64xf32>
    %2 = tpu.matmul %0, %1, %cst {dimension_numbers = #tpu.dot_dimension_numbers<[1], [0], [0], [1], [0, 0, 1, 1], [], []>} : vector<32x784xbf16>, vector<784x64xbf16>, vector<32x64xf32> -> vector<32x64xf32>
    %c0_3 = arith.constant 0 : index
    %c0_4 = arith.constant 0 : index
    %3 = vector.load %arg3[%c0_3, %c0_4] : memref<1x64xf32, #tpu.memory_space<vmem>>, vector<1x64xf32>
    %4 = vector.broadcast %3 : vector<1x64xf32> to vector<32x64xf32>
    %5 = arith.addf %2, %4 : vector<32x64xf32>
    %cst_5 = arith.constant 0.000000e+00 : f32
    %6 = vector.broadcast %cst_5 : f32 to vector<32x64xf32>
    %7 = arith.maximumf %5, %6 : vector<32x64xf32>
    %8 = arith.truncf %7 : vector<32x64xf32> to vector<32x64xbf16>
    %c0_6 = arith.constant 0 : index
    %c0_7 = arith.constant 0 : index
    %9 = vector.load %arg4[%c0_6, %c0_7] : memref<64x64xbf16, #tpu.memory_space<vmem>>, vector<64x64xbf16>
    %cst_8 = arith.constant dense<0.000000e+00> : vector<32x64xf32>
    %10 = tpu.matmul %8, %9, %cst_8 {dimension_numbers = #tpu.dot_dimension_numbers<[1], [0], [0], [1], [0, 0, 1, 1], [], []>} : vector<32x64xbf16>, vector<64x64xbf16>, vector<32x64xf32> -> vector<32x64xf32>
    %c0_9 = arith.constant 0 : index
    %c0_10 = arith.constant 0 : index
    %11 = vector.load %arg5[%c0_9, %c0_10] : memref<1x64xf32, #tpu.memory_space<vmem>>, vector<1x64xf32>
    %12 = vector.broadcast %11 : vector<1x64xf32> to vector<32x64xf32>
    %13 = arith.addf %10, %12 : vector<32x64xf32>
    %cst_11 = arith.constant 0.000000e+00 : f32
    %14 = vector.broadcast %cst_11 : f32 to vector<32x64xf32>
    %15 = arith.maximumf %13, %14 : vector<32x64xf32>
    %16 = arith.truncf %15 : vector<32x64xf32> to vector<32x64xbf16>
    %c0_12 = arith.constant 0 : index
    %c0_13 = arith.constant 0 : index
    %17 = vector.load %arg6[%c0_12, %c0_13] : memref<64x64xbf16, #tpu.memory_space<vmem>>, vector<64x64xbf16>
    %cst_14 = arith.constant dense<0.000000e+00> : vector<32x64xf32>
    %18 = tpu.matmul %16, %17, %cst_14 {dimension_numbers = #tpu.dot_dimension_numbers<[1], [0], [0], [1], [0, 0, 1, 1], [], []>} : vector<32x64xbf16>, vector<64x64xbf16>, vector<32x64xf32> -> vector<32x64xf32>
    %c0_15 = arith.constant 0 : index
    %c0_16 = arith.constant 0 : index
    %19 = vector.load %arg7[%c0_15, %c0_16] : memref<1x64xf32, #tpu.memory_space<vmem>>, vector<1x64xf32>
    %20 = vector.broadcast %19 : vector<1x64xf32> to vector<32x64xf32>
    %21 = arith.addf %18, %20 : vector<32x64xf32>
    %cst_17 = arith.constant 0.000000e+00 : f32
    %22 = vector.broadcast %cst_17 : f32 to vector<32x64xf32>
    %23 = arith.maximumf %21, %22 : vector<32x64xf32>
    %24 = arith.truncf %23 : vector<32x64xf32> to vector<32x64xbf16>
    %c0_18 = arith.constant 0 : index
    %c0_19 = arith.constant 0 : index
    %25 = vector.load %arg8[%c0_18, %c0_19] : memref<64x128xbf16, #tpu.memory_space<vmem>>, vector<64x128xbf16>
    %cst_20 = arith.constant dense<0.000000e+00> : vector<32x128xf32>
    %26 = tpu.matmul %24, %25, %cst_20 {dimension_numbers = #tpu.dot_dimension_numbers<[1], [0], [0], [1], [0, 0, 1, 1], [], []>} : vector<32x64xbf16>, vector<64x128xbf16>, vector<32x128xf32> -> vector<32x128xf32>
    %c0_21 = arith.constant 0 : index
    %c0_22 = arith.constant 0 : index
    %27 = vector.load %arg9[%c0_21, %c0_22] : memref<1x128xf32, #tpu.memory_space<vmem>>, vector<1x128xf32>
    %28 = vector.broadcast %27 : vector<1x128xf32> to vector<32x128xf32>
    %29 = arith.addf %26, %28 : vector<32x128xf32>
    %cst_23 = arith.constant dense<0xFF800000> : vector<32xf32>
    %30 = vector.multi_reduction <maximumf>, %29, %cst_23 [1] : vector<32x128xf32> to vector<32xf32>
    %31 = vector.shape_cast %30 : vector<32xf32> to vector<32x1xf32>
    %32 = vector.broadcast %31 : vector<32x1xf32> to vector<32x128xf32>
    %33 = arith.subf %29, %32 : vector<32x128xf32>
    %34 = math.exp %33 : vector<32x128xf32>
    %cst_24 = arith.constant dense<0.000000e+00> : vector<32xf32>
    %35 = vector.multi_reduction <add>, %34, %cst_24 [1] : vector<32x128xf32> to vector<32xf32>
    %36 = vector.shape_cast %35 : vector<32xf32> to vector<32x1xf32>
    %37 = math.log %36 : vector<32x1xf32>
    %38 = vector.broadcast %37 : vector<32x1xf32> to vector<32x128xf32>
    %39 = arith.subf %33, %38 : vector<32x128xf32>
    %c0_25 = arith.constant 0 : index
    %c0_26 = arith.constant 0 : index
    %40 = vector.load %arg10[%c0_25, %c0_26] : memref<32x128xf32, #tpu.memory_space<vmem>>, vector<32x128xf32>
    tpu.vector_store %arg10[%c0_25, %c0_26], %39 {strides = array<i32>} : memref<32x128xf32, #tpu.memory_space<vmem>>, vector<32x128xf32>,
    return
  }
  func.func @transform_0(%arg0: i32) -> (i32, i32) {
    %c0_i32 = arith.constant 0 : i32
    %c0_i32_0 = arith.constant 0 : i32
    return %arg0, %c0_i32 : i32, i32
  }
  func.func @transform_1(%arg0: i32) -> (i32, i32) {
    %c0_i32 = arith.constant 0 : i32
    %c0_i32_0 = arith.constant 0 : i32
    %c0_i32_1 = arith.constant 0 : i32
    return %c0_i32, %c0_i32_0 : i32, i32
  }
  func.func @transform_2(%arg0: i32) -> (i32, i32) {
    %c0_i32 = arith.constant 0 : i32
    %c0_i32_0 = arith.constant 0 : i32
    %c0_i32_1 = arith.constant 0 : i32
    return %c0_i32, %c0_i32_0 : i32, i32
  }
  func.func @transform_3(%arg0: i32) -> (i32, i32) {
    %c0_i32 = arith.constant 0 : i32
    %c0_i32_0 = arith.constant 0 : i32
    %c0_i32_1 = arith.constant 0 : i32
    return %c0_i32, %c0_i32_0 : i32, i32
  }
  func.func @transform_4(%arg0: i32) -> (i32, i32) {
    %c0_i32 = arith.constant 0 : i32
    %c0_i32_0 = arith.constant 0 : i32
    %c0_i32_1 = arith.constant 0 : i32
    return %c0_i32, %c0_i32_0 : i32, i32
  }
  func.func @transform_5(%arg0: i32) -> (i32, i32) {
    %c0_i32 = arith.constant 0 : i32
    %c0_i32_0 = arith.constant 0 : i32
    %c0_i32_1 = arith.constant 0 : i32
    return %c0_i32, %c0_i32_0 : i32, i32
  }
  func.func @transform_6(%arg0: i32) -> (i32, i32) {
    %c0_i32 = arith.constant 0 : i32
    %c0_i32_0 = arith.constant 0 : i32
    %c0_i32_1 = arith.constant 0 : i32
    return %c0_i32, %c0_i32_0 : i32, i32
  }
  func.func @transform_7(%arg0: i32) -> (i32, i32) {
    %c0_i32 = arith.constant 0 : i32
    %c0_i32_0 = arith.constant 0 : i32
    %c0_i32_1 = arith.constant 0 : i32
    return %c0_i32, %c0_i32_0 : i32, i32
  }
  func.func @transform_8(%arg0: i32) -> (i32, i32) {
    %c0_i32 = arith.constant 0 : i32
    %c0_i32_0 = arith.constant 0 : i32
    %c0_i32_1 = arith.constant 0 : i32
    return %c0_i32, %c0_i32_0 : i32, i32
  }
  func.func @transform_9(%arg0: i32) -> (i32, i32) {
    %c0_i32 = arith.constant 0 : i32
    %c0_i32_0 = arith.constant 0 : i32
    return %arg0, %c0_i32 : i32, i32
  }
}

</mosaic_0001>

<llo_original>
// kernel: tpu_custom_call.1
$region0: #{tpu_custom_call.1}
  #allocation0 [shape = 'u32[]', space=smem, size = 0x4, offset = 0x4, fixed_abs, tag = 'smem constant byte address 0x4 - core index']
  #allocation1 [shape = 'u32[72,128]{1,0:T(1,128)}', space=vmem, size = 0x9000, scoped, tag = 'internal scratch']
  %s0 = inlined_call_operand.vmem [shape: bf16[64,784], index: 0, kind: input, shape index: {}]
  %s1 = inlined_call_operand.vmem [shape: bf16[784,64], index: 1, kind: input, shape index: {}]
  %s2 = inlined_call_operand.vmem [shape: f32[1,64], index: 2, kind: input, shape index: {}]
  %s3 = inlined_call_operand.vmem [shape: bf16[64,64], index: 3, kind: input, shape index: {}]
  %s4 = inlined_call_operand.vmem [shape: f32[1,64], index: 4, kind: input, shape index: {}]
  %s5 = inlined_call_operand.vmem [shape: bf16[64,64], index: 5, kind: input, shape index: {}]
  %s6 = inlined_call_operand.vmem [shape: f32[1,64], index: 6, kind: input, shape index: {}]
  %s7 = inlined_call_operand.vmem [shape: bf16[64,128], index: 7, kind: input, shape index: {}]
  %s8 = inlined_call_operand.vmem [shape: f32[1,128], index: 8, kind: input, shape index: {}]
  %s9 = inlined_call_operand.hbm [shape: f32[64,128], index: 9, kind: output, shape index: {}]
  %s10 = sld [smem:[#allocation0]]
  $region69: #{tpu_custom_call.1} parent=0
    _
  %s12 = ssub.s32 1, %s10
  %s13 = scalar_select 0, %s12, %s10
  $region1: #{tpu_custom_call.1} parent=0
    #allocation2 [shape = 'u8[32768]{0}', space=vmem, size = 0x8000, scoped, tag = 'output window, operand 0']
    #allocation3 [shape = 's32[2]{0}', space=sflag, size = 0x8, scoped, tag = 'scoped memory for tpu_custom_call.1']
    %14 = vsyncpa [#allocation3], 0
    %s15 = scalar_lea.sflag [#allocation3], 1
    %16 = vsyncpa %s15, 0
    loop: start=0, step=1, limit=4
    $region2: #{tpu_custom_call.1} parent=1 // loop_pre_header
      _
    $region3: #{tpu_custom_call.1} parent=1 // loop_header
      %s18 = sphi 0, %s22
      %p19 = scmp.ge.s32.totalorder %s18, 4
      %s28 = sphi 0, %s30
      %s31 = sphi 0, %s28
      %s32 = sphi 0, %s31
      %s48 = sphi 0, %s32
      %s52 = sphi 0, %s52
      %s54 = sphi 0, %s52
      %s55 = sphi 0, %s54
      %s69 = sphi 0, %s55
      %s73 = sphi 0, %s73
      %s75 = sphi 0, %s73
      %s76 = sphi 0, %s75
      %s90 = sphi 0, %s76
      %s94 = sphi 0, %s94
      %s96 = sphi 0, %s94
      %s97 = sphi 0, %s96
      %s111 = sphi 0, %s97
      %s115 = sphi 0, %s115
      %s117 = sphi 0, %s115
      %s118 = sphi 0, %s117
      %s132 = sphi 0, %s118
      %s136 = sphi 0, %s136
      %s138 = sphi 0, %s136
      %s139 = sphi 0, %s138
      %s153 = sphi 0, %s139
      %s157 = sphi 0, %s157
      %s159 = sphi 0, %s157
      %s160 = sphi 0, %s159
      %s174 = sphi 0, %s160
      %s178 = sphi 0, %s178
      %s180 = sphi 0, %s178
      %s181 = sphi 0, %s180
      %s195 = sphi 0, %s181
      %s199 = sphi 0, %s199
      %s201 = sphi 0, %s199
      %s202 = sphi 0, %s201
      %s216 = sphi 0, %s202
      %s222 = sphi 0, %s224
      %s225 = sphi 0, %s222
      %s226 = sphi 0, %s225
      %s242 = sphi 0, %s226
    $region4: #{tpu_custom_call.1} parent=1 // loop_header_branch
      %21 = sbr.rel (%p19) target = $region8
    $region5: #{tpu_custom_call.1} parent=1 // loop_body
      %s23 = ssub.s32 %s18, 1
      %s24 = ssub.s32 %s18, 2
      %s25 = sadd.s32 %s18, 1
      %s26 = ssub.s32 %s18, %s25
      %p27 = scmp.eq.s32.totalorder %s26, 0
      %s29 = sadd.s32 %s28, 1
      %s30 = scalar_select %p27, %s28, %s29
      %p33 = pneg %p27
      %p34 = scmp.eq.s32.totalorder %s18, 1
      %p35 = por %p33, %p34
      %p36 = scmp.ne.s32.totalorder %s28, %s31
      %p37 = scmp.eq.s32.totalorder %s18, 0
      %p38 = por %p36, %p37
      %p39 = scmp.ne.s32.totalorder %s28, %s31
      %p40 = scmp.eq.s32.totalorder %s23, 1
      %p41 = por %p39, %p40
      %p42 = scmp.ne.s32.totalorder %s31, %s32
      %p43 = scmp.eq.s32.totalorder %s23, 0
      %p44 = por %p42, %p43
      %p45 = scmp.ne.s32.totalorder %s31, %s32
      %p46 = scmp.eq.s32.totalorder %s24, 1
      %p47 = por %p45, %p46
      %p49 = scmp.ne.s32.totalorder %s32, %s48
      %p50 = scmp.eq.s32.totalorder %s24, 0
      %p51 = por %p49, %p50
      %s53 = sadd.s32 %s52, 1
      %p56 = scmp.eq.s32.totalorder %s18, 1
      %p57 = scmp.ne.s32.totalorder %s52, %s54
      %p58 = scmp.eq.s32.totalorder %s18, 0
      %p59 = por %p57, %p58
      %p60 = scmp.ne.s32.totalorder %s52, %s54
      %p61 = scmp.eq.s32.totalorder %s23, 1
      %p62 = por %p60, %p61
      %p63 = scmp.ne.s32.totalorder %s54, %s55
      %p64 = scmp.eq.s32.totalorder %s23, 0
      %p65 = por %p63, %p64
      %p66 = scmp.ne.s32.totalorder %s54, %s55
      %p67 = scmp.eq.s32.totalorder %s24, 1
      %p68 = por %p66, %p67
      %p70 = scmp.ne.s32.totalorder %s55, %s69
      %p71 = scmp.eq.s32.totalorder %s24, 0
      %p72 = por %p70, %p71
      %s74 = sadd.s32 %s73, 1
      %p77 = scmp.eq.s32.totalorder %s18, 1
      %p78 = scmp.ne.s32.totalorder %s73, %s75
      %p79 = scmp.eq.s32.totalorder %s18, 0
      %p80 = por %p78, %p79
      %p81 = scmp.ne.s32.totalorder %s73, %s75
      %p82 = scmp.eq.s32.totalorder %s23, 1
      %p83 = por %p81, %p82
      %p84 = scmp.ne.s32.totalorder %s75, %s76
      %p85 = scmp.eq.s32.totalorder %s23, 0
      %p86 = por %p84, %p85
      %p87 = scmp.ne.s32.totalorder %s75, %s76
      %p88 = scmp.eq.s32.totalorder %s24, 1
      %p89 = por %p87, %p88
      %p91 = scmp.ne.s32.totalorder %s76, %s90
      %p92 = scmp.eq.s32.totalorder %s24, 0
      %p93 = por %p91, %p92
      %s95 = sadd.s32 %s94, 1
      %p98 = scmp.eq.s32.totalorder %s18, 1
      %p99 = scmp.ne.s32.totalorder %s94, %s96
      %p100 = scmp.eq.s32.totalorder %s18, 0
      %p101 = por %p99, %p100
      %p102 = scmp.ne.s32.totalorder %s94, %s96
      %p103 = scmp.eq.s32.totalorder %s23, 1
      %p104 = por %p102, %p103
      %p105 = scmp.ne.s32.totalorder %s96, %s97
      %p106 = scmp.eq.s32.totalorder %s23, 0
      %p107 = por %p105, %p106
      %p108 = scmp.ne.s32.totalorder %s96, %s97
      %p109 = scmp.eq.s32.totalorder %s24, 1
      %p110 = por %p108, %p109
      %p112 = scmp.ne.s32.totalorder %s97, %s111
      %p113 = scmp.eq.s32.totalorder %s24, 0
      %p114 = por %p112, %p113
      %s116 = sadd.s32 %s115, 1
      %p119 = scmp.eq.s32.totalorder %s18, 1
      %p120 = scmp.ne.s32.totalorder %s115, %s117
      %p121 = scmp.eq.s32.totalorder %s18, 0
      %p122 = por %p120, %p121
      %p123 = scmp.ne.s32.totalorder %s115, %s117
      %p124 = scmp.eq.s32.totalorder %s23, 1
      %p125 = por %p123, %p124
      %p126 = scmp.ne.s32.totalorder %s117, %s118
      %p127 = scmp.eq.s32.totalorder %s23, 0
      %p128 = por %p126, %p127
      %p129 = scmp.ne.s32.totalorder %s117, %s118
      %p130 = scmp.eq.s32.totalorder %s24, 1
      %p131 = por %p129, %p130
      %p133 = scmp.ne.s32.totalorder %s118, %s132
      %p134 = scmp.eq.s32.totalorder %s24, 0
      %p135 = por %p133, %p134
      %s137 = sadd.s32 %s136, 1
      %p140 = scmp.eq.s32.totalorder %s18, 1
      %p141 = scmp.ne.s32.totalorder %s136, %s138
      %p142 = scmp.eq.s32.totalorder %s18, 0
      %p143 = por %p141, %p142
      %p144 = scmp.ne.s32.totalorder %s136, %s138
      %p145 = scmp.eq.s32.totalorder %s23, 1
      %p146 = por %p144, %p145
      %p147 = scmp.ne.s32.totalorder %s138, %s139
      %p148 = scmp.eq.s32.totalorder %s23, 0
      %p149 = por %p147, %p148
      %p150 = scmp.ne.s32.totalorder %s138, %s139
      %p151 = scmp.eq.s32.totalorder %s24, 1
      %p152 = por %p150, %p151
      %p154 = scmp.ne.s32.totalorder %s139, %s153
      %p155 = scmp.eq.s32.totalorder %s24, 0
      %p156 = por %p154, %p155
      %s158 = sadd.s32 %s157, 1
      %p161 = scmp.eq.s32.totalorder %s18, 1
      %p162 = scmp.ne.s32.totalorder %s157, %s159
      %p163 = scmp.eq.s32.totalorder %s18, 0
      %p164 = por %p162, %p163
      %p165 = scmp.ne.s32.totalorder %s157, %s159
      %p166 = scmp.eq.s32.totalorder %s23, 1
      %p167 = por %p165, %p166
      %p168 = scmp.ne.s32.totalorder %s159, %s160
      %p169 = scmp.eq.s32.totalorder %s23, 0
      %p170 = por %p168, %p169
      %p171 = scmp.ne.s32.totalorder %s159, %s160
      %p172 = scmp.eq.s32.totalorder %s24, 1
      %p173 = por %p171, %p172
      %p175 = scmp.ne.s32.totalorder %s160, %s174
      %p176 = scmp.eq.s32.totalorder %s24, 0
      %p177 = por %p175, %p176
      %s179 = sadd.s32 %s178, 1
      %p182 = scmp.eq.s32.totalorder %s18, 1
      %p183 = scmp.ne.s32.totalorder %s178, %s180
      %p184 = scmp.eq.s32.totalorder %s18, 0
      %p185 = por %p183, %p184
      %p186 = scmp.ne.s32.totalorder %s178, %s180
      %p187 = scmp.eq.s32.totalorder %s23, 1
      %p188 = por %p186, %p187
      %p189 = scmp.ne.s32.totalorder %s180, %s181
      %p190 = scmp.eq.s32.totalorder %s23, 0
      %p191 = por %p189, %p190
      %p192 = scmp.ne.s32.totalorder %s180, %s181
      %p193 = scmp.eq.s32.totalorder %s24, 1
      %p194 = por %p192, %p193
      %p196 = scmp.ne.s32.totalorder %s181, %s195
      %p197 = scmp.eq.s32.totalorder %s24, 0
      %p198 = por %p196, %p197
      %s200 = sadd.s32 %s199, 1
      %p203 = scmp.eq.s32.totalorder %s18, 1
      %p204 = scmp.ne.s32.totalorder %s199, %s201
      %p205 = scmp.eq.s32.totalorder %s18, 0
      %p206 = por %p204, %p205
      %p207 = scmp.ne.s32.totalorder %s199, %s201
      %p208 = scmp.eq.s32.totalorder %s23, 1
      %p209 = por %p207, %p208
      %p210 = scmp.ne.s32.totalorder %s201, %s202
      %p211 = scmp.eq.s32.totalorder %s23, 0
      %p212 = por %p210, %p211
      %p213 = scmp.ne.s32.totalorder %s201, %s202
      %p214 = scmp.eq.s32.totalorder %s24, 1
      %p215 = por %p213, %p214
      %p217 = scmp.ne.s32.totalorder %s202, %s216
      %p218 = scmp.eq.s32.totalorder %s24, 0
      %p219 = por %p217, %p218
      %s220 = ssub.s32 %s18, %s25
      %p221 = scmp.eq.s32.totalorder %s220, 0
      %s223 = sadd.s32 %s222, 1
      %s224 = scalar_select %p221, %s222, %s223
      %p227 = pneg %p221
      %p228 = scmp.eq.s32.totalorder %s18, 1
      %p229 = por %p227, %p228
      %p230 = scmp.ne.s32.totalorder %s222, %s225
      %p231 = scmp.eq.s32.totalorder %s18, 0
      %p232 = por %p230, %p231
      %p233 = scmp.ne.s32.totalorder %s222, %s225
      %p234 = scmp.eq.s32.totalorder %s23, 1
      %p235 = por %p233, %p234
      %p236 = scmp.ne.s32.totalorder %s225, %s226
      %p237 = scmp.eq.s32.totalorder %s23, 0
      %p238 = por %p236, %p237
      %p239 = scmp.ne.s32.totalorder %s225, %s226
      %p240 = scmp.eq.s32.totalorder %s24, 1
      %p241 = por %p239, %p240
      %p243 = scmp.ne.s32.totalorder %s226, %s242
      %p244 = scmp.eq.s32.totalorder %s24, 0
      %p245 = por %p243, %p244
      %p246 = scmp.le.s32.totalorder 1, %s18
      %p247 = scmp.lt.s32.totalorder %s18, 3
      %p248 = pnand %p246, %p247
      %p249 = pneg %p248
      // Predicated region
      $region9: #{tpu_custom_call.1} parent=5 // pred_check
        _
      $region10: #{tpu_custom_call.1} parent=5 // pred_check_branch
        %251 = sbr.rel (%p248) target = $region12
      $region11: #{tpu_custom_call.1} parent=5 // pred_region
        %s252 = ssub.s32 %s18, 1
        // Predicated region
        $region13: #{tpu_custom_call.1} parent=11 // pred_check
          %p253 = pneg %p65
        $region14: #{tpu_custom_call.1} parent=11 // pred_check_branch
          %255 = sbr.rel (%p253) target = $region16
        $region15: #{tpu_custom_call.1} parent=11 // pred_region
          _
        $region16: #{tpu_custom_call.1} parent=11 // pred_fallthru
          _
        // Predicated region
        $region17: #{tpu_custom_call.1} parent=11 // pred_check
          %p256 = pneg %p86
        $region18: #{tpu_custom_call.1} parent=11 // pred_check_branch
          %258 = sbr.rel (%p256) target = $region20
        $region19: #{tpu_custom_call.1} parent=11 // pred_region
          _
        $region20: #{tpu_custom_call.1} parent=11 // pred_fallthru
          _
        // Predicated region
        $region21: #{tpu_custom_call.1} parent=11 // pred_check
          %p259 = pneg %p107
        $region22: #{tpu_custom_call.1} parent=11 // pred_check_branch
          %261 = sbr.rel (%p259) target = $region24
        $region23: #{tpu_custom_call.1} parent=11 // pred_region
          _
        $region24: #{tpu_custom_call.1} parent=11 // pred_fallthru
          _
        // Predicated region
        $region25: #{tpu_custom_call.1} parent=11 // pred_check
          %p262 = pneg %p128
        $region26: #{tpu_custom_call.1} parent=11 // pred_check_branch
          %264 = sbr.rel (%p262) target = $region28
        $region27: #{tpu_custom_call.1} parent=11 // pred_region
          _
        $region28: #{tpu_custom_call.1} parent=11 // pred_fallthru
          _
        // Predicated region
        $region29: #{tpu_custom_call.1} parent=11 // pred_check
          %p265 = pneg %p149
        $region30: #{tpu_custom_call.1} parent=11 // pred_check_branch
          %267 = sbr.rel (%p265) target = $region32
        $region31: #{tpu_custom_call.1} parent=11 // pred_region
          _
        $region32: #{tpu_custom_call.1} parent=11 // pred_fallthru
          _
        // Predicated region
        $region33: #{tpu_custom_call.1} parent=11 // pred_check
          %p268 = pneg %p170
        $region34: #{tpu_custom_call.1} parent=11 // pred_check_branch
          %270 = sbr.rel (%p268) target = $region36
        $region35: #{tpu_custom_call.1} parent=11 // pred_region
          _
        $region36: #{tpu_custom_call.1} parent=11 // pred_fallthru
          _
        // Predicated region
        $region37: #{tpu_custom_call.1} parent=11 // pred_check
          %p271 = pneg %p191
        $region38: #{tpu_custom_call.1} parent=11 // pred_check_branch
          %273 = sbr.rel (%p271) target = $region40
        $region39: #{tpu_custom_call.1} parent=11 // pred_region
          _
        $region40: #{tpu_custom_call.1} parent=11 // pred_fallthru
          _
        // Predicated region
        $region41: #{tpu_custom_call.1} parent=11 // pred_check
          %p274 = pneg %p212
        $region42: #{tpu_custom_call.1} parent=11 // pred_check_branch
          %276 = sbr.rel (%p274) target = $region44
        $region43: #{tpu_custom_call.1} parent=11 // pred_region
          _
        $region44: #{tpu_custom_call.1} parent=11 // pred_fallthru
          _
      $region12: #{tpu_custom_call.1} parent=5 // pred_fallthru
        _
      %p277 = scmp.lt.s32.totalorder %s18, 2
      // Predicated region
      $region45: #{tpu_custom_call.1} parent=5 // pred_check
        %p278 = pneg %p277
      $region46: #{tpu_custom_call.1} parent=5 // pred_check_branch
        %280 = sbr.rel (%p278) target = $region48
      $region47: #{tpu_custom_call.1} parent=5 // pred_region
        // Predicated region
        $region49: #{tpu_custom_call.1} parent=47 // pred_check
          %p281 = pneg %p38
        $region50: #{tpu_custom_call.1} parent=47 // pred_check_branch
          %283 = sbr.rel (%p281) target = $region52
        $region51: #{tpu_custom_call.1} parent=47 // pred_region
          %s284 = smul.u32 4, %s18
          %p285 = scmp.lt.s32.totalorder %s284, 7
          %s286 = scalar_select %p285, %s284, 7
          %s287 = smul.addr %s286, 7
          %s288 = smul.addr %s287, 4
          %s289 = scalar_lea.vmem %s0, %s288
          %s290 = smul.u32 4, %s18
        $region52: #{tpu_custom_call.1} parent=47 // pred_fallthru
          _
      $region48: #{tpu_custom_call.1} parent=5 // pred_fallthru
        _
      %p291 = scmp.le.s32.totalorder 1, %s18
      %p292 = scmp.lt.s32.totalorder %s18, 3
      %p293 = pnand %p291, %p292
      %p294 = pneg %p293
      // Predicated region
      $region53: #{tpu_custom_call.1} parent=5 // pred_check
        _
      $region54: #{tpu_custom_call.1} parent=5 // pred_check_branch
        %296 = sbr.rel (%p293) target = $region56
      $region55: #{tpu_custom_call.1} parent=5 // pred_region
        %s297 = ssub.s32 %s18, 1
        %s298 = smul.u32 4, %s23
        %p299 = scmp.lt.s32.totalorder %s298, 7
        %s300 = scalar_select %p299, %s298, 7
        %s301 = smul.addr %s300, 7
        %s302 = smul.addr %s301, 4
        %s303 = scalar_lea.vmem %s0, %s302
        %p304 = pneg %p44
        %p305 = pneg %p41
        %p306 = pneg %p65
        %p307 = pneg %p62
        %p308 = pneg %p86
        %p309 = pneg %p83
        %p310 = pneg %p107
        %p311 = pneg %p104
        %p312 = pneg %p128
        %p313 = pneg %p125
        %p314 = pneg %p149
        %p315 = pneg %p146
        %p316 = pneg %p170
        %p317 = pneg %p167
        %p318 = pneg %p191
        %p319 = pneg %p188
        %p320 = pneg %p212
        %p321 = pneg %p209
        %p322 = pneg %p238
        %p323 = pneg %p235
        %s324 = sand.u32 %s225, 1
        %s325 = scalar_lea.sflag [#allocation3], %s324
        %s326 = sand.u32 %s225, 1
        %s327 = smul.addr %s326, 32
        %s328 = scalar_lea.vmem [#allocation2], %s327
        %s329 = smul.u32 4, %s23
        %p330 = scmp.lt.s32.totalorder %s329, 7
        %s331 = scalar_select %p330, %s329, 7
        %s332 = smul.addr %s331, 7
        %s333 = smul.addr %s332, 4
        %s334 = scalar_lea.vmem %s0, %s333
        %s335 = smul.u32 4, %s23
        %s336 = smul.u32 4, %s23
        %v338 = vld [vmem:[%s334] sm:$0xff]
        %v339 = vld [vmem:[%s334 + $0x8] sm:$0xff]
        %v340 = vld [vmem:[%s334 + $0x10] sm:$0xff]
        %v341 = vld [vmem:[%s334 + $0x18] sm:$0xf]
        %v342 = vld [vmem:[%s334 + $0x1c] sm:$0xff]
        %v343 = vld [vmem:[%s334 + $0x24] sm:$0xff]
        %v344 = vld [vmem:[%s334 + $0x2c] sm:$0xff]
        %v345 = vld [vmem:[%s334 + $0x34] sm:$0xf]
        %v346 = vld [vmem:[%s334 + $0x38] sm:$0xff]
        %v347 = vld [vmem:[%s334 + $0x40] sm:$0xff]
        %v348 = vld [vmem:[%s334 + $0x48] sm:$0xff]
        %v349 = vld [vmem:[%s334 + $0x50] sm:$0xf]
        %v350 = vld [vmem:[%s334 + $0x54] sm:$0xff]
        %v351 = vld [vmem:[%s334 + $0x5c] sm:$0xff]
        %v352 = vld [vmem:[%s334 + $0x64] sm:$0xff]
        %v353 = vld [vmem:[%s334 + $0x6c] sm:$0xf]
        %v354 = vld [vmem:[%s1] sm:$0xf]
        %v355 = vld [vmem:[%s1 + $0x4] sm:$0xf]
        %v356 = vld [vmem:[%s1 + $0x8] sm:$0xf]
        %v357 = vld [vmem:[%s1 + $0xc] sm:$0xf]
        %v358 = vld [vmem:[%s1 + $0x10] sm:$0xf]
        %v359 = vld [vmem:[%s1 + $0x14] sm:$0xf]
        %v360 = vld [vmem:[%s1 + $0x18] sm:$0xf]
        %v361 = vld [vmem:[%s1 + $0x1c] sm:$0xf]
        %v362 = vld [vmem:[%s1 + $0x20] sm:$0xf]
        %v363 = vld [vmem:[%s1 + $0x24] sm:$0xf]
        %v364 = vld [vmem:[%s1 + $0x28] sm:$0xf]
        %v365 = vld [vmem:[%s1 + $0x2c] sm:$0xf]
        %v366 = vld [vmem:[%s1 + $0x30] sm:$0xf]
        %v367 = vld [vmem:[%s1 + $0x34] sm:$0xf]
        %v368 = vld [vmem:[%s1 + $0x38] sm:$0xf]
        %v369 = vld [vmem:[%s1 + $0x3c] sm:$0xf]
        %v370 = vld [vmem:[%s1 + $0x40] sm:$0xf]
        %v371 = vld [vmem:[%s1 + $0x44] sm:$0xf]
        %v372 = vld [vmem:[%s1 + $0x48] sm:$0xf]
        %v373 = vld [vmem:[%s1 + $0x4c] sm:$0xf]
        %v374 = vld [vmem:[%s1 + $0x50] sm:$0xf]
        %v375 = vld [vmem:[%s1 + $0x54] sm:$0xf]
        %v376 = vld [vmem:[%s1 + $0x58] sm:$0xf]
        %v377 = vld [vmem:[%s1 + $0x5c] sm:$0xf]
        %v378 = vld [vmem:[%s1 + $0x60] sm:$0xf]
        %v379 = vld [vmem:[%s1 + $0x64] sm:$0xf]
        %v380 = vld [vmem:[%s1 + $0x68] sm:$0xf]
        %v381 = vld [vmem:[%s1 + $0x6c] sm:$0xf]
        %v382 = vld [vmem:[%s1 + $0x70] sm:$0xf]
        %v383 = vld [vmem:[%s1 + $0x74] sm:$0xf]
        %v384 = vld [vmem:[%s1 + $0x78] sm:$0xf]
        %v385 = vld [vmem:[%s1 + $0x7c] sm:$0xf]
        %v386 = vld [vmem:[%s1 + $0x80] sm:$0xf]
        %v387 = vld [vmem:[%s1 + $0x84] sm:$0xf]
        %v388 = vld [vmem:[%s1 + $0x88] sm:$0xf]
        %v389 = vld [vmem:[%s1 + $0x8c] sm:$0xf]
        %v390 = vld [vmem:[%s1 + $0x90] sm:$0xf]
        %v391 = vld [vmem:[%s1 + $0x94] sm:$0xf]
        %v392 = vld [vmem:[%s1 + $0x98] sm:$0xf]
        %v393 = vld [vmem:[%s1 + $0x9c] sm:$0xf]
        %v394 = vld [vmem:[%s1 + $0xa0] sm:$0xf]
        %v395 = vld [vmem:[%s1 + $0xa4] sm:$0xf]
        %v396 = vld [vmem:[%s1 + $0xa8] sm:$0xf]
        %v397 = vld [vmem:[%s1 + $0xac] sm:$0xf]
        %v398 = vld [vmem:[%s1 + $0xb0] sm:$0xf]
        %v399 = vld [vmem:[%s1 + $0xb4] sm:$0xf]
        %v400 = vld [vmem:[%s1 + $0xb8] sm:$0xf]
        %v401 = vld [vmem:[%s1 + $0xbc] sm:$0xf]
        %v402 = vld [vmem:[%s1 + $0xc0] sm:$0xf]
        %v403 = vld [vmem:[%s1 + $0xc4] sm:$0xf]
        %v404 = vld [vmem:[%s1 + $0xc8] sm:$0xf]
        %v405 = vld [vmem:[%s1 + $0xcc] sm:$0xf]
        %v406 = vld [vmem:[%s1 + $0xd0] sm:$0xf]
        %v407 = vld [vmem:[%s1 + $0xd4] sm:$0xf]
        %v408 = vld [vmem:[%s1 + $0xd8] sm:$0xf]
        %v409 = vld [vmem:[%s1 + $0xdc] sm:$0xf]
        %v410 = vld [vmem:[%s1 + $0xe0] sm:$0xf]
        %v411 = vld [vmem:[%s1 + $0xe4] sm:$0xf]
        %v412 = vld [vmem:[%s1 + $0xe8] sm:$0xf]
        %v413 = vld [vmem:[%s1 + $0xec] sm:$0xf]
        %v414 = vld [vmem:[%s1 + $0xf0] sm:$0xf]
        %v415 = vld [vmem:[%s1 + $0xf4] sm:$0xf]
        %v416 = vld [vmem:[%s1 + $0xf8] sm:$0xf]
        %v417 = vld [vmem:[%s1 + $0xfc] sm:$0xf]
        %v418 = vld [vmem:[%s1 + $0x100] sm:$0xf]
        %v419 = vld [vmem:[%s1 + $0x104] sm:$0xf]
        %v420 = vld [vmem:[%s1 + $0x108] sm:$0xf]
        %v421 = vld [vmem:[%s1 + $0x10c] sm:$0xf]
        %v422 = vld [vmem:[%s1 + $0x110] sm:$0xf]
        %v423 = vld [vmem:[%s1 + $0x114] sm:$0xf]
        %v424 = vld [vmem:[%s1 + $0x118] sm:$0xf]
        %v425 = vld [vmem:[%s1 + $0x11c] sm:$0xf]
        %v426 = vld [vmem:[%s1 + $0x120] sm:$0xf]
        %v427 = vld [vmem:[%s1 + $0x124] sm:$0xf]
        %v428 = vld [vmem:[%s1 + $0x128] sm:$0xf]
        %v429 = vld [vmem:[%s1 + $0x12c] sm:$0xf]
        %v430 = vld [vmem:[%s1 + $0x130] sm:$0xf]
        %v431 = vld [vmem:[%s1 + $0x134] sm:$0xf]
        %v432 = vld [vmem:[%s1 + $0x138] sm:$0xf]
        %v433 = vld [vmem:[%s1 + $0x13c] sm:$0xf]
        %v434 = vld [vmem:[%s1 + $0x140] sm:$0xf]
        %v435 = vld [vmem:[%s1 + $0x144] sm:$0xf]
        %v436 = vld [vmem:[%s1 + $0x148] sm:$0xf]
        %v437 = vld [vmem:[%s1 + $0x14c] sm:$0xf]
        %v438 = vld [vmem:[%s1 + $0x150] sm:$0xf]
        %v439 = vld [vmem:[%s1 + $0x154] sm:$0xf]
        %v440 = vld [vmem:[%s1 + $0x158] sm:$0xf]
        %v441 = vld [vmem:[%s1 + $0x15c] sm:$0xf]
        %v442 = vld [vmem:[%s1 + $0x160] sm:$0xf]
        %v443 = vld [vmem:[%s1 + $0x164] sm:$0xf]
        %v444 = vld [vmem:[%s1 + $0x168] sm:$0xf]
        %v445 = vld [vmem:[%s1 + $0x16c] sm:$0xf]
        %v446 = vld [vmem:[%s1 + $0x170] sm:$0xf]
        %v447 = vld [vmem:[%s1 + $0x174] sm:$0xf]
        %v448 = vld [vmem:[%s1 + $0x178] sm:$0xf]
        %v449 = vld [vmem:[%s1 + $0x17c] sm:$0xf]
        %v450 = vld [vmem:[%s1 + $0x180] sm:$0xf]
        %v451 = vld [vmem:[%s1 + $0x184] sm:$0xf]
        %v452 = vld [vmem:[%s2] sm:$0x1]
        %v454 = vperm.slane %v452, 0
        %v472 = vunpack.c.l.b16 %v338
        %v473 = vunpack.c.h.b16 %v338
        %v474 = vunpack.c.l.b16 %v339
        %v475 = vunpack.c.h.b16 %v339
        %v476 = vunpack.c.l.b16 %v340
        %v477 = vunpack.c.h.b16 %v340
        %v478 = vunpack.c.l.b16 %v341
        %v479 = vunpack.c.l.b16 %v342
        %v480 = vunpack.c.h.b16 %v342
        %v481 = vunpack.c.l.b16 %v343
        %v482 = vunpack.c.h.b16 %v343
        %v483 = vunpack.c.l.b16 %v344
        %v484 = vunpack.c.h.b16 %v344
        %v485 = vunpack.c.l.b16 %v345
        %v486 = vunpack.c.l.b16 %v346
        %v487 = vunpack.c.h.b16 %v346
        %v488 = vunpack.c.l.b16 %v347
        %v489 = vunpack.c.h.b16 %v347
        %v490 = vunpack.c.l.b16 %v348
        %v491 = vunpack.c.h.b16 %v348
        %v492 = vunpack.c.l.b16 %v349
        %v493 = vunpack.c.l.b16 %v350
        %v494 = vunpack.c.h.b16 %v350
        %v495 = vunpack.c.l.b16 %v351
        %v496 = vunpack.c.h.b16 %v351
        %v497 = vunpack.c.l.b16 %v352
        %v498 = vunpack.c.h.b16 %v352
        %v499 = vunpack.c.l.b16 %v353
        %v500 = vpack.c.b16 %v479, %v472
        %v501 = vpack.c.b16 %v480, %v473
        %v502 = vpack.c.b16 %v481, %v474
        %v503 = vpack.c.b16 %v482, %v475
        %v504 = vpack.c.b16 %v483, %v476
        %v505 = vpack.c.b16 %v484, %v477
        %v506 = vpack.c.b16 %v485, %v478
        %v507 = vpack.c.b16 %v493, %v486
        %v508 = vpack.c.b16 %v494, %v487
        %v509 = vpack.c.b16 %v495, %v488
        %v510 = vpack.c.b16 %v496, %v489
        %v511 = vpack.c.b16 %v497, %v490
        %v512 = vpack.c.b16 %v498, %v491
        %v513 = vpack.c.b16 %v499, %v492
        %v624 = vunpack.c.l.b16 %v354
        %v625 = vunpack.c.l.b16 %v355
        %v626 = vunpack.c.l.b16 %v356
        %v627 = vunpack.c.l.b16 %v357
        %v628 = vunpack.c.l.b16 %v358
        %v629 = vunpack.c.l.b16 %v359
        %v630 = vunpack.c.l.b16 %v360
        %v631 = vunpack.c.l.b16 %v361
        %v632 = vunpack.c.l.b16 %v362
        %v633 = vunpack.c.l.b16 %v363
        %v634 = vunpack.c.l.b16 %v364
        %v635 = vunpack.c.l.b16 %v365
        %v636 = vunpack.c.l.b16 %v366
        %v637 = vunpack.c.l.b16 %v367
        %v638 = vunpack.c.l.b16 %v368
        %v639 = vunpack.c.l.b16 %v369
        %v640 = vunpack.c.l.b16 %v370
        %v641 = vunpack.c.l.b16 %v371
        %v642 = vunpack.c.l.b16 %v372
        %v643 = vunpack.c.l.b16 %v373
        %v644 = vunpack.c.l.b16 %v374
        %v645 = vunpack.c.l.b16 %v375
        %v646 = vunpack.c.l.b16 %v376
        %v647 = vunpack.c.l.b16 %v377
        %v648 = vunpack.c.l.b16 %v378
        %v649 = vunpack.c.l.b16 %v379
        %v650 = vunpack.c.l.b16 %v380
        %v651 = vunpack.c.l.b16 %v381
        %v652 = vunpack.c.l.b16 %v382
        %v653 = vunpack.c.l.b16 %v383
        %v654 = vunpack.c.l.b16 %v384
        %v655 = vunpack.c.l.b16 %v385
        %v656 = vunpack.c.l.b16 %v386
        %v657 = vunpack.c.l.b16 %v387
        %v658 = vunpack.c.l.b16 %v388
        %v659 = vunpack.c.l.b16 %v389
        %v660 = vunpack.c.l.b16 %v390
        %v661 = vunpack.c.l.b16 %v391
        %v662 = vunpack.c.l.b16 %v392
        %v663 = vunpack.c.l.b16 %v393
        %v664 = vunpack.c.l.b16 %v394
        %v665 = vunpack.c.l.b16 %v395
        %v666 = vunpack.c.l.b16 %v396
        %v667 = vunpack.c.l.b16 %v397
        %v668 = vunpack.c.l.b16 %v398
        %v669 = vunpack.c.l.b16 %v399
        %v670 = vunpack.c.l.b16 %v400
        %v671 = vunpack.c.l.b16 %v401
        %v672 = vunpack.c.l.b16 %v402
        %v673 = vunpack.c.l.b16 %v403
        %v674 = vunpack.c.l.b16 %v404
        %v675 = vunpack.c.l.b16 %v405
        %v676 = vunpack.c.l.b16 %v406
        %v677 = vunpack.c.l.b16 %v407
        %v678 = vunpack.c.l.b16 %v408
        %v679 = vunpack.c.l.b16 %v409
        %v680 = vunpack.c.l.b16 %v410
        %v681 = vunpack.c.l.b16 %v411
        %v682 = vunpack.c.l.b16 %v412
        %v683 = vunpack.c.l.b16 %v413
        %v684 = vunpack.c.l.b16 %v414
        %v685 = vunpack.c.l.b16 %v415
        %v686 = vunpack.c.l.b16 %v416
        %v687 = vunpack.c.l.b16 %v417
        %v688 = vunpack.c.l.b16 %v418
        %v689 = vunpack.c.l.b16 %v419
        %v690 = vunpack.c.l.b16 %v420
        %v691 = vunpack.c.l.b16 %v421
        %v692 = vunpack.c.l.b16 %v422
        %v693 = vunpack.c.l.b16 %v423
        %v694 = vunpack.c.l.b16 %v424
        %v695 = vunpack.c.l.b16 %v425
        %v696 = vunpack.c.l.b16 %v426
        %v697 = vunpack.c.l.b16 %v427
        %v698 = vunpack.c.l.b16 %v428
        %v699 = vunpack.c.l.b16 %v429
        %v700 = vunpack.c.l.b16 %v430
        %v701 = vunpack.c.l.b16 %v431
        %v702 = vunpack.c.l.b16 %v432
        %v703 = vunpack.c.l.b16 %v433
        %v704 = vunpack.c.l.b16 %v434
        %v705 = vunpack.c.l.b16 %v435
        %v706 = vunpack.c.l.b16 %v436
        %v707 = vunpack.c.l.b16 %v437
        %v708 = vunpack.c.l.b16 %v438
        %v709 = vunpack.c.l.b16 %v439
        %v710 = vunpack.c.l.b16 %v440
        %v711 = vunpack.c.l.b16 %v441
        %v712 = vunpack.c.l.b16 %v442
        %v713 = vunpack.c.l.b16 %v443
        %v714 = vunpack.c.l.b16 %v444
        %v715 = vunpack.c.l.b16 %v445
        %v716 = vunpack.c.l.b16 %v446
        %v717 = vunpack.c.l.b16 %v447
        %v718 = vunpack.c.l.b16 %v448
        %v719 = vunpack.c.l.b16 %v449
        %v720 = vunpack.c.l.b16 %v450
        %v721 = vunpack.c.l.b16 %v451
        %v722 = vpack.c.b16 %v625, %v624
        %v723 = vpack.c.b16 %v627, %v626
        %v724 = vpack.c.b16 %v629, %v628
        %v725 = vpack.c.b16 %v631, %v630
        %v726 = vpack.c.b16 %v633, %v632
        %v727 = vpack.c.b16 %v635, %v634
        %v728 = vpack.c.b16 %v637, %v636
        %v729 = vpack.c.b16 %v639, %v638
        %v730 = vpack.c.b16 %v641, %v640
        %v731 = vpack.c.b16 %v643, %v642
        %v732 = vpack.c.b16 %v645, %v644
        %v733 = vpack.c.b16 %v647, %v646
        %v734 = vpack.c.b16 %v649, %v648
        %v735 = vpack.c.b16 %v651, %v650
        %v736 = vpack.c.b16 %v653, %v652
        %v737 = vpack.c.b16 %v655, %v654
        %v738 = vpack.c.b16 %v657, %v656
        %v739 = vpack.c.b16 %v659, %v658
        %v740 = vpack.c.b16 %v661, %v660
        %v741 = vpack.c.b16 %v663, %v662
        %v742 = vpack.c.b16 %v665, %v664
        %v743 = vpack.c.b16 %v667, %v666
        %v744 = vpack.c.b16 %v669, %v668
        %v745 = vpack.c.b16 %v671, %v670
        %v746 = vpack.c.b16 %v673, %v672
        %v747 = vpack.c.b16 %v675, %v674
        %v748 = vpack.c.b16 %v677, %v676
        %v749 = vpack.c.b16 %v679, %v678
        %v750 = vpack.c.b16 %v681, %v680
        %v751 = vpack.c.b16 %v683, %v682
        %v752 = vpack.c.b16 %v685, %v684
        %v753 = vpack.c.b16 %v687, %v686
        %v754 = vpack.c.b16 %v689, %v688
        %v755 = vpack.c.b16 %v691, %v690
        %v756 = vpack.c.b16 %v693, %v692
        %v757 = vpack.c.b16 %v695, %v694
        %v758 = vpack.c.b16 %v697, %v696
        %v759 = vpack.c.b16 %v699, %v698
        %v760 = vpack.c.b16 %v701, %v700
        %v761 = vpack.c.b16 %v703, %v702
        %v762 = vpack.c.b16 %v705, %v704
        %v763 = vpack.c.b16 %v707, %v706
        %v764 = vpack.c.b16 %v709, %v708
        %v765 = vpack.c.b16 %v711, %v710
        %v766 = vpack.c.b16 %v713, %v712
        %v767 = vpack.c.b16 %v715, %v714
        %v768 = vpack.c.b16 %v717, %v716
        %v769 = vpack.c.b16 %v719, %v718
        %v770 = vpack.c.b16 %v721, %v720
        %vm820 = vcmask 130048
        %v822 = vsel %vm820, %v506, 0
        %v825 = vsel %vm820, %v513, 0
        %827 = vmatpush.bf16.msra.mxu0 %v729
        %828 = vmatpush.bf16.msra.mxu0 %v728
        %829 = vmatpush.bf16.msra.mxu0 %v727
        %830 = vmatpush.bf16.msra.mxu0 %v726
        %831 = vmatpush.bf16.msra.mxu0 %v725
        %832 = vmatpush.bf16.msra.mxu0 %v724
        %833 = vmatpush.bf16.msra.mxu0 %v723
        %834 = vmatpush.bf16.msra.mxu0 %v722
        %835 = vmatmul.bf16.gmra.mxu0 %v500
        %v836 = vpop.f32.mrf.mxu0
        %v837 = vadd.f32 %v454, %v836
        %v838 = vpop.f32.mrf.mxu0
        %v839 = vadd.f32 %v454, %v838
        %840 = vmatmul.bf16.gmra.mxu0 %v507
        %v841 = vpop.f32.mrf.mxu0
        %v842 = vadd.f32 %v454, %v841
        %v843 = vpop.f32.mrf.mxu0
        %v844 = vadd.f32 %v454, %v843
        %845 = vdwg.mxu0
        %846 = vmatpush.bf16.msra.mxu0 %v737
        %847 = vmatpush.bf16.msra.mxu0 %v736
        %848 = vmatpush.bf16.msra.mxu0 %v735
        %849 = vmatpush.bf16.msra.mxu0 %v734
        %850 = vmatpush.bf16.msra.mxu0 %v733
        %851 = vmatpush.bf16.msra.mxu0 %v732
        %852 = vmatpush.bf16.msra.mxu0 %v731
        %853 = vmatpush.bf16.msra.mxu0 %v730
        %854 = vmatmul.bf16.gmra.mxu0 %v501
        %v855 = vpop.f32.mrf.mxu0
        %v856 = vadd.f32 %v837, %v855
        %v857 = vpop.f32.mrf.mxu0
        %v858 = vadd.f32 %v839, %v857
        %859 = vmatmul.bf16.gmra.mxu0 %v508
        %v860 = vpop.f32.mrf.mxu0
        %v861 = vadd.f32 %v842, %v860
        %v862 = vpop.f32.mrf.mxu0
        %v863 = vadd.f32 %v844, %v862
        %864 = vdwg.mxu0
        %865 = vmatpush.bf16.msra.mxu0 %v745
        %866 = vmatpush.bf16.msra.mxu0 %v744
        %867 = vmatpush.bf16.msra.mxu0 %v743
        %868 = vmatpush.bf16.msra.mxu0 %v742
        %869 = vmatpush.bf16.msra.mxu0 %v741
        %870 = vmatpush.bf16.msra.mxu0 %v740
        %871 = vmatpush.bf16.msra.mxu0 %v739
        %872 = vmatpush.bf16.msra.mxu0 %v738
        %873 = vmatmul.bf16.gmra.mxu0 %v502
        %v874 = vpop.f32.mrf.mxu0
        %v875 = vadd.f32 %v856, %v874
        %v876 = vpop.f32.mrf.mxu0
        %v877 = vadd.f32 %v858, %v876
        %878 = vmatmul.bf16.gmra.mxu0 %v509
        %v879 = vpop.f32.mrf.mxu0
        %v880 = vadd.f32 %v861, %v879
        %v881 = vpop.f32.mrf.mxu0
        %v882 = vadd.f32 %v863, %v881
        %883 = vdwg.mxu0
        %884 = vmatpush.bf16.msra.mxu0 %v753
        %885 = vmatpush.bf16.msra.mxu0 %v752
        %886 = vmatpush.bf16.msra.mxu0 %v751
        %887 = vmatpush.bf16.msra.mxu0 %v750
        %888 = vmatpush.bf16.msra.mxu0 %v749
        %889 = vmatpush.bf16.msra.mxu0 %v748
        %890 = vmatpush.bf16.msra.mxu0 %v747
        %891 = vmatpush.bf16.msra.mxu0 %v746
        %892 = vmatmul.bf16.gmra.mxu0 %v503
        %v893 = vpop.f32.mrf.mxu0
        %v894 = vadd.f32 %v875, %v893
        %v895 = vpop.f32.mrf.mxu0
        %v896 = vadd.f32 %v877, %v895
        %897 = vmatmul.bf16.gmra.mxu0 %v510
        %v898 = vpop.f32.mrf.mxu0
        %v899 = vadd.f32 %v880, %v898
        %v900 = vpop.f32.mrf.mxu0
        %v901 = vadd.f32 %v882, %v900
        %902 = vdwg.mxu0
        %903 = vmatpush.bf16.msra.mxu0 %v761
        %904 = vmatpush.bf16.msra.mxu0 %v760
        %905 = vmatpush.bf16.msra.mxu0 %v759
        %906 = vmatpush.bf16.msra.mxu0 %v758
        %907 = vmatpush.bf16.msra.mxu0 %v757
        %908 = vmatpush.bf16.msra.mxu0 %v756
        %909 = vmatpush.bf16.msra.mxu0 %v755
        %910 = vmatpush.bf16.msra.mxu0 %v754
        %911 = vmatmul.bf16.gmra.mxu0 %v504
        %v912 = vpop.f32.mrf.mxu0
        %v913 = vadd.f32 %v894, %v912
        %v914 = vpop.f32.mrf.mxu0
        %v915 = vadd.f32 %v896, %v914
        %916 = vmatmul.bf16.gmra.mxu0 %v511
        %v917 = vpop.f32.mrf.mxu0
        %v918 = vadd.f32 %v899, %v917
        %v919 = vpop.f32.mrf.mxu0
        %v920 = vadd.f32 %v901, %v919
        %921 = vdwg.mxu0
        %922 = vmatpush.bf16.msra.mxu0 %v769
        %923 = vmatpush.bf16.msra.mxu0 %v768
        %924 = vmatpush.bf16.msra.mxu0 %v767
        %925 = vmatpush.bf16.msra.mxu0 %v766
        %926 = vmatpush.bf16.msra.mxu0 %v765
        %927 = vmatpush.bf16.msra.mxu0 %v764
        %928 = vmatpush.bf16.msra.mxu0 %v763
        %929 = vmatpush.bf16.msra.mxu0 %v762
        %930 = vmatmul.bf16.gmra.mxu0 %v505
        %v931 = vpop.f32.mrf.mxu0
        %v932 = vadd.f32 %v913, %v931
        %v933 = vpop.f32.mrf.mxu0
        %v934 = vadd.f32 %v915, %v933
        %935 = vmatmul.bf16.gmra.mxu0 %v512
        %v936 = vpop.f32.mrf.mxu0
        %v937 = vadd.f32 %v918, %v936
        %v938 = vpop.f32.mrf.mxu0
        %v939 = vadd.f32 %v920, %v938
        %940 = vdwg.mxu0
        %941 = vmatpush.bf16.msra.mxu0 0
        %942 = vmatpush.bf16.msra.mxu0 0
        %943 = vmatpush.bf16.msra.mxu0 0
        %944 = vmatpush.bf16.msra.mxu0 0
        %945 = vmatpush.bf16.msra.mxu0 0
        %946 = vmatpush.bf16.msra.mxu0 0
        %947 = vmatpush.bf16.msra.mxu0 0
        %948 = vmatpush.bf16.msra.mxu0 %v770
        %949 = vmatmul.bf16.gmra.mxu0 %v822
        %v950 = vpop.f32.mrf.mxu0
        %v951 = vadd.f32 %v932, %v950
        %v952 = vpop.f32.mrf.mxu0
        %v953 = vadd.f32 %v934, %v952
        %954 = vmatmul.bf16.gmra.mxu0 %v825
        %v955 = vpop.f32.mrf.mxu0
        %v956 = vadd.f32 %v937, %v955
        %v957 = vpop.f32.mrf.mxu0
        %v958 = vadd.f32 %v939, %v957
        %959 = vdwg.mxu0
        %v960 = vmax.f32 %v951, 0.0
        %v961 = vmax.f32 %v953, 0.0
        %v962 = vmax.f32 %v956, 0.0
        %v963 = vmax.f32 %v958, 0.0
        %v964 = vpack.c.bf16 %v961, %v960
        %v965 = vpack.c.bf16 %v963, %v962
        %v966 = vld [vmem:[%s3] sm:$0xf]
        %v967 = vld [vmem:[%s3 + $0x4] sm:$0xf]
        %v968 = vld [vmem:[%s3 + $0x8] sm:$0xf]
        %v969 = vld [vmem:[%s3 + $0xc] sm:$0xf]
        %v970 = vld [vmem:[%s3 + $0x10] sm:$0xf]
        %v971 = vld [vmem:[%s3 + $0x14] sm:$0xf]
        %v972 = vld [vmem:[%s3 + $0x18] sm:$0xf]
        %v973 = vld [vmem:[%s3 + $0x1c] sm:$0xf]
        %v974 = vld [vmem:[%s4] sm:$0x1]
        %v976 = vperm.slane %v974, 0
        %v986 = vunpack.c.l.b16 %v966
        %v987 = vunpack.c.l.b16 %v967
        %v988 = vunpack.c.l.b16 %v968
        %v989 = vunpack.c.l.b16 %v969
        %v990 = vunpack.c.l.b16 %v970
        %v991 = vunpack.c.l.b16 %v971
        %v992 = vunpack.c.l.b16 %v972
        %v993 = vunpack.c.l.b16 %v973
        %v994 = vpack.c.b16 %v987, %v986
        %v995 = vpack.c.b16 %v989, %v988
        %v996 = vpack.c.b16 %v991, %v990
        %v997 = vpack.c.b16 %v993, %v992
        %vm1002 = vcmask 523264
        %v1004 = vsel %vm1002, %v964, 0
        %v1007 = vsel %vm1002, %v965, 0
        %1009 = vmatpush.bf16.msra.mxu0 0
        %1010 = vmatpush.bf16.msra.mxu0 0
        %1011 = vmatpush.bf16.msra.mxu0 0
        %1012 = vmatpush.bf16.msra.mxu0 0
        %1013 = vmatpush.bf16.msra.mxu0 %v997
        %1014 = vmatpush.bf16.msra.mxu0 %v996
        %1015 = vmatpush.bf16.msra.mxu0 %v995
        %1016 = vmatpush.bf16.msra.mxu0 %v994
        %1017 = vmatmul.bf16.gmra.mxu0 %v1004
        %v1018 = vpop.f32.mrf.mxu0
        %v1019 = vadd.f32 %v976, %v1018
        %v1020 = vpop.f32.mrf.mxu0
        %v1021 = vadd.f32 %v976, %v1020
        %1022 = vmatmul.bf16.gmra.mxu0 %v1007
        %v1023 = vpop.f32.mrf.mxu0
        %v1024 = vadd.f32 %v976, %v1023
        %v1025 = vpop.f32.mrf.mxu0
        %v1026 = vadd.f32 %v976, %v1025
        %1027 = vdwg.mxu0
        %v1028 = vmax.f32 %v1019, 0.0
        %v1029 = vmax.f32 %v1021, 0.0
        %v1030 = vmax.f32 %v1024, 0.0
        %v1031 = vmax.f32 %v1026, 0.0
        %v1032 = vpack.c.bf16 %v1029, %v1028
        %v1033 = vpack.c.bf16 %v1031, %v1030
        %v1034 = vld [vmem:[%s5] sm:$0xf]
        %v1035 = vld [vmem:[%s5 + $0x4] sm:$0xf]
        %v1036 = vld [vmem:[%s5 + $0x8] sm:$0xf]
        %v1037 = vld [vmem:[%s5 + $0xc] sm:$0xf]
        %v1038 = vld [vmem:[%s5 + $0x10] sm:$0xf]
        %v1039 = vld [vmem:[%s5 + $0x14] sm:$0xf]
        %v1040 = vld [vmem:[%s5 + $0x18] sm:$0xf]
        %v1041 = vld [vmem:[%s5 + $0x1c] sm:$0xf]
        %v1042 = vld [vmem:[%s6] sm:$0x1]
        %v1044 = vperm.slane %v1042, 0
        %v1054 = vunpack.c.l.b16 %v1034
        %v1055 = vunpack.c.l.b16 %v1035
        %v1056 = vunpack.c.l.b16 %v1036
        %v1057 = vunpack.c.l.b16 %v1037
        %v1058 = vunpack.c.l.b16 %v1038
        %v1059 = vunpack.c.l.b16 %v1039
        %v1060 = vunpack.c.l.b16 %v1040
        %v1061 = vunpack.c.l.b16 %v1041
        %v1062 = vpack.c.b16 %v1055, %v1054
        %v1063 = vpack.c.b16 %v1057, %v1056
        %v1064 = vpack.c.b16 %v1059, %v1058
        %v1065 = vpack.c.b16 %v1061, %v1060
        %v1071 = vsel %vm1002, %v1032, 0
        %v1074 = vsel %vm1002, %v1033, 0
        %1076 = vmatpush.bf16.msra.mxu0 0
        %1077 = vmatpush.bf16.msra.mxu0 0
        %1078 = vmatpush.bf16.msra.mxu0 0
        %1079 = vmatpush.bf16.msra.mxu0 0
        %1080 = vmatpush.bf16.msra.mxu0 %v1065
        %1081 = vmatpush.bf16.msra.mxu0 %v1064
        %1082 = vmatpush.bf16.msra.mxu0 %v1063
        %1083 = vmatpush.bf16.msra.mxu0 %v1062
        %1084 = vmatmul.bf16.gmra.mxu0 %v1071
        %v1085 = vpop.f32.mrf.mxu0
        %v1086 = vadd.f32 %v1044, %v1085
        %v1087 = vpop.f32.mrf.mxu0
        %v1088 = vadd.f32 %v1044, %v1087
        %1089 = vmatmul.bf16.gmra.mxu0 %v1074
        %v1090 = vpop.f32.mrf.mxu0
        %v1091 = vadd.f32 %v1044, %v1090
        %v1092 = vpop.f32.mrf.mxu0
        %v1093 = vadd.f32 %v1044, %v1092
        %1094 = vdwg.mxu0
        %v1095 = vmax.f32 %v1086, 0.0
        %v1096 = vmax.f32 %v1088, 0.0
        %v1097 = vmax.f32 %v1091, 0.0
        %v1098 = vmax.f32 %v1093, 0.0
        %v1099 = vpack.c.bf16 %v1096, %v1095
        %v1100 = vpack.c.bf16 %v1098, %v1097
        %v1101 = vld [vmem:[%s7] sm:$0xf]
        %v1102 = vld [vmem:[%s7 + $0x4] sm:$0xf]
        %v1103 = vld [vmem:[%s7 + $0x8] sm:$0xf]
        %v1104 = vld [vmem:[%s7 + $0xc] sm:$0xf]
        %v1105 = vld [vmem:[%s7 + $0x10] sm:$0xf]
        %v1106 = vld [vmem:[%s7 + $0x14] sm:$0xf]
        %v1107 = vld [vmem:[%s7 + $0x18] sm:$0xf]
        %v1108 = vld [vmem:[%s7 + $0x1c] sm:$0xf]
        %v1109 = vld [vmem:[%s8] sm:$0x1]
        %v1111 = vperm.slane %v1109, 0
        %v1121 = vunpack.c.l.b16 %v1101
        %v1122 = vunpack.c.l.b16 %v1102
        %v1123 = vunpack.c.l.b16 %v1103
        %v1124 = vunpack.c.l.b16 %v1104
        %v1125 = vunpack.c.l.b16 %v1105
        %v1126 = vunpack.c.l.b16 %v1106
        %v1127 = vunpack.c.l.b16 %v1107
        %v1128 = vunpack.c.l.b16 %v1108
        %v1129 = vpack.c.b16 %v1122, %v1121
        %v1130 = vpack.c.b16 %v1124, %v1123
        %v1131 = vpack.c.b16 %v1126, %v1125
        %v1132 = vpack.c.b16 %v1128, %v1127
        %v1138 = vsel %vm1002, %v1099, 0
        %v1141 = vsel %vm1002, %v1100, 0
        %1143 = vmatpush.bf16.msra.mxu0 0
        %1144 = vmatpush.bf16.msra.mxu0 0
        %1145 = vmatpush.bf16.msra.mxu0 0
        %1146 = vmatpush.bf16.msra.mxu0 0
        %1147 = vmatpush.bf16.msra.mxu0 %v1132
        %1148 = vmatpush.bf16.msra.mxu0 %v1131
        %1149 = vmatpush.bf16.msra.mxu0 %v1130
        %1150 = vmatpush.bf16.msra.mxu0 %v1129
        %1151 = vmatmul.bf16.gmra.mxu0 %v1138
        %v1152 = vpop.f32.mrf.mxu0
        %v1153 = vadd.f32 %v1111, %v1152
        %v1154 = vpop.f32.mrf.mxu0
        %v1155 = vadd.f32 %v1111, %v1154
        %1156 = vmatmul.bf16.gmra.mxu0 %v1141
        %v1157 = vpop.f32.mrf.mxu0
        %v1158 = vadd.f32 %v1111, %v1157
        %v1159 = vpop.f32.mrf.mxu0
        %v1160 = vadd.f32 %v1111, %v1159
        %1161 = vdwg.mxu0
        %1162 = vmax.xlane.f32.xlu0 %v1153
        %v1163 = vpop.xlane.xlu0 %1162
        %1164 = vmax.xlane.f32.xlu0 %v1155
        %v1165 = vpop.xlane.xlu0 %1164
        %1166 = vmax.xlane.f32.xlu0 %v1158
        %v1167 = vpop.xlane.xlu0 %1166
        %1168 = vmax.xlane.f32.xlu0 %v1160
        %v1169 = vpop.xlane.xlu0 %1168
        %v1170 = vsub.f32 %v1153, %v1163
        %v1171 = vsub.f32 %v1155, %v1165
        %v1172 = vsub.f32 %v1158, %v1167
        %v1173 = vsub.f32 %v1160, %v1169
        %v1174 = vmul.f32 %v1170, 1.442695
        %v1175 = vpow.pop %v1174
        %v1176 = vmul.f32 %v1171, 1.442695
        %v1177 = vpow.pop %v1176
        %v1178 = vmul.f32 %v1172, 1.442695
        %v1179 = vpow.pop %v1178
        %v1180 = vmul.f32 %v1173, 1.442695
        %v1181 = vpow.pop %v1180
        %1182 = vadd.xlane.f32.xlu0 %v1175
        %v1183 = vpop.xlane.xlu0 %1182
        %1184 = vadd.xlane.f32.xlu0 %v1177
        %v1185 = vpop.xlane.xlu0 %1184
        %1186 = vadd.xlane.f32.xlu0 %v1179
        %v1187 = vpop.xlane.xlu0 %1186
        %1188 = vadd.xlane.f32.xlu0 %v1181
        %v1189 = vpop.xlane.xlu0 %1188
        %v1190 = vlog2.pop %v1183
        %v1191 = vmul.f32 %v1190, 0.6931472
        %v1192 = vlog2.pop %v1185
        %v1193 = vmul.f32 %v1192, 0.6931472
        %v1194 = vlog2.pop %v1187
        %v1195 = vmul.f32 %v1194, 0.6931472
        %v1196 = vlog2.pop %v1189
        %v1197 = vmul.f32 %v1196, 0.6931472
        %v1198 = vsub.f32 %v1170, %v1191
        %v1199 = vsub.f32 %v1171, %v1193
        %v1200 = vsub.f32 %v1172, %v1195
        %v1201 = vsub.f32 %v1173, %v1197
        %1202 = vst [vmem:[%s328] sm:$0xff] %v1198
        %1203 = vst [vmem:[%s328 + $0x8] sm:$0xff] %v1199
        %1204 = vst [vmem:[%s328 + $0x10] sm:$0xff] %v1200
        %1205 = vst [vmem:[%s328 + $0x18] sm:$0xff] %v1201
        %s1206 = sand.u32 %s225, 1
        %s1207 = scalar_lea.sflag [#allocation3], %s1206
        %s1208 = sand.u32 %s225, 1
        %s1209 = smul.addr %s1208, 32
        %s1210 = scalar_lea.vmem [#allocation2], %s1209
        // Predicated region
        $region57: #{tpu_custom_call.1} parent=55 // pred_check
          %p1211 = pneg %p235
        $region58: #{tpu_custom_call.1} parent=55 // pred_check_branch
          %1213 = sbr.rel (%p1211) target = $region60
        $region59: #{tpu_custom_call.1} parent=55 // pred_region
          %s1214 = smul.u32 4, %s23
          %1216 = vsyncadd %s1207, 0
          %s1217 = smul.addr %s1214, 8
          %s1218 = scalar_lea.hbm %s9, %s1217
          %s1219 = sshll.u32 %s1210, 4
          %s1220 = int_to_ptr.vmem [resolvable:$true] %s1219
          %s1221 = sshll.u32 %s1218, 4
          %s1222 = int_to_ptr.hbm [resolvable:$true] %s1221
          %1227 = dma.vmem_to_hbm [thread:$0]  %s1220, 512, %s1222, %s1207, 128, 128, 8
        $region60: #{tpu_custom_call.1} parent=55 // pred_fallthru
          _
      $region56: #{tpu_custom_call.1} parent=5 // pred_fallthru
        _
      %p1228 = scmp.le.s32.totalorder 2, %s18
      // Predicated region
      $region61: #{tpu_custom_call.1} parent=5 // pred_check
        %p1229 = pneg %p1228
      $region62: #{tpu_custom_call.1} parent=5 // pred_check_branch
        %1231 = sbr.rel (%p1229) target = $region64
      $region63: #{tpu_custom_call.1} parent=5 // pred_region
        %s1232 = ssub.s32 %s18, 2
        // Predicated region
        $region65: #{tpu_custom_call.1} parent=63 // pred_check
          %p1233 = pneg %p241
        $region66: #{tpu_custom_call.1} parent=63 // pred_check_branch
          %1235 = sbr.rel (%p1233) target = $region68
        $region67: #{tpu_custom_call.1} parent=63 // pred_region
          %s1236 = sand.u32 %s226, 1
          %s1237 = scalar_lea.sflag [#allocation3], %s1236
          %s1238 = sand.u32 %s226, 1
          %s1239 = smul.addr %s1238, 32
          %s1240 = scalar_lea.vmem [#allocation2], %s1239
          %1242 = dma.done %s1237, 512
        $region68: #{tpu_custom_call.1} parent=63 // pred_fallthru
          _
      $region64: #{tpu_custom_call.1} parent=5 // pred_fallthru
        _
    $region6: #{tpu_custom_call.1} parent=1 // loop_footer
      %s22 = sadd.s32 1, %s18
    $region7: #{tpu_custom_call.1} parent=1 // loop_footer_branch
      %17 = sbr.rel target = $region3
    $region8: #{tpu_custom_call.1} parent=1 // loop_exit
      _
    %1243 = vsyncpa [#allocation3], 1
    %s1244 = scalar_lea.sflag [#allocation3], 1
    %1245 = vsyncpa %s1244, 1

</llo_original>
